<compile_context>
chip_gen: v5e
topology: v5e:2x2
jax: 0.10.0
libtpu: 0.0.40
codegen_flags: <defaults>
</compile_context>

<pallas_src>
import functools

import jax
import jax.numpy as jnp
from jax.experimental import pallas as pl
from jax.experimental.pallas import tpu as pltpu

EPS = 1e-5
_TARGET_BLOCK_BYTES = 2 * 1024 * 1024   # ~2 MiB h row tiles (>=85% HBM roofline)
_FUSED_VMEM_BUDGET = 12 * 1024 * 1024   # fused-path cap, safe under v7x's 64 MiB


def _default_vmem_limit_bytes():
    """~3/4 of physical VMEM: ~96 MiB on v5e/v6e (128 MiB), ~48 MiB on v7x."""
    try:
        cap = int(pltpu.get_tpu_info().vmem_capacity_bytes)
    except Exception:
        cap = 64 * 1024 * 1024          # assume the smallest (v7x) if unknown
    return (cap // 4) * 3


# ----------------------------------------------------------------------------
# Fused path (small problems): stats + finalize + apply in one kernel,
# everything resident in VMEM, h read from HBM exactly once.
# ----------------------------------------------------------------------------
def _fused_kernel(starts_col_ref, ends_col_ref, starts_row_ref, ends_row_ref,
                  x_ref, gamma_ref, beta_ref, out_ref, *, num_features, eps):
    f = num_features
    x = x_ref[...].astype(jnp.float32)                       # (N, F)
    n = x.shape[0]
    g = starts_col_ref.shape[0]

    # Per-graph membership, (G, N) one-hot built from [start, end) bounds.
    cols = jax.lax.broadcasted_iota(jnp.int32, (g, n), 1)
    member = jnp.logical_and(cols >= starts_col_ref[...],
                             cols < ends_col_ref[...]).astype(jnp.float32)

    # One MXU matmul produces [sum(x) | sum(x^2)] per graph.
    xs = jnp.concatenate([x, x * x], axis=-1)                 # (N, 2F)
    s = jnp.dot(member, xs, preferred_element_type=jnp.float32,
                precision=jax.lax.Precision.HIGHEST)          # (G, 2F)

    cnt = (ends_col_ref[...] - starts_col_ref[...]).astype(jnp.float32)  # (G, 1)
    mean = s[:, :f] / jnp.maximum(cnt, 1.0)
    var = jnp.maximum(s[:, f:] - cnt * mean * mean, 0.0) / jnp.maximum(cnt - 1.0, 1.0)
    inv = 1.0 / (jnp.sqrt(var) + eps)
    scale = gamma_ref[...] * inv                              # (G, F)
    shift = beta_ref[...] - mean * scale                      # (G, F)
    params = jnp.concatenate([scale, shift], axis=-1)         # (G, 2F)

    # Per-row gather of (scale, shift) with a single one-hot matmul
    # (one-hot entries are exact, so default MXU precision is safe here).
    rows = jax.lax.broadcasted_iota(jnp.int32, (n, 1), 0)
    member_t = jnp.logical_and(rows >= starts_row_ref[...],
                               rows < ends_row_ref[...]).astype(jnp.float32)  # (N, G)
    rp = jnp.dot(member_t, params, preferred_element_type=jnp.float32)        # (N, 2F)
    out_ref[...] = (x * rp[:, :f] + rp[:, f:]).astype(out_ref.dtype)


# ----------------------------------------------------------------------------
# Two-pass tiled path (large problems).
# ----------------------------------------------------------------------------
def _stats_kernel(starts_ref, ends_ref, x_ref, psum_ref, *,
                  n_rows, tiles_per_split):
    """Accumulate per-graph [sum(x) | sum(x^2)] into the resident output."""
    c = pl.program_id(0)                  # "parallel" split (v7x dual-TC)
    k = pl.program_id(1)                  # reduction over row tiles

    @pl.when(k == 0)
    def _init():
        psum_ref[...] = jnp.zeros_like(psum_ref)

    tile = x_ref.shape[0]
    # Logical row-tile index: on the short split it can point past the real
    # range (the index_map clamps the DMA; the mask below zeroes the data).
    row0 = (c * tiles_per_split + k) * tile

    x = x_ref[...].astype(jnp.float32)                        # (tile, F)
    rows = row0 + jax.lax.broadcasted_iota(jnp.int32, (tile, 1), 0)
    # Mask x (not the one-hot): OOB garbage could be NaN and 0*NaN would poison.
    x = jnp.where(rows < n_rows, x, 0.0)

    g = psum_ref.shape[0]
    cols = row0 + jax.lax.broadcasted_iota(jnp.int32, (g, tile), 1)
    member = jnp.logical_and(cols >= starts_ref[...],
                             cols < ends_ref[...]).astype(jnp.float32)  # (G, tile)

    xs = jnp.concatenate([x, x * x], axis=-1)                 # (tile, 2F)
    psum_ref[...] += jnp.dot(member, xs, preferred_element_type=jnp.float32,
                             precision=jax.lax.Precision.HIGHEST)


def _apply_kernel(starts_ref, ends_ref, x_ref, params_ref, out_ref, *,
                  num_features):
    """y = x * scale[graph(row)] + shift[graph(row)], one fused multiply-add."""
    f = num_features
    tile = x_ref.shape[0]
    row0 = pl.program_id(0) * tile
    x = x_ref[...].astype(jnp.float32)                        # (tile, F)
    rows = row0 + jax.lax.broadcasted_iota(jnp.int32, (tile, 1), 0)
    member_t = jnp.logical_and(rows >= starts_ref[...],
                               rows < ends_ref[...]).astype(jnp.float32)  # (tile, G)
    rp = jnp.dot(member_t, params_ref[...],
                 preferred_element_type=jnp.float32)          # (tile, 2F)
    out_ref[...] = (x * rp[:, :f] + rp[:, f:]).astype(out_ref.dtype)


# ----------------------------------------------------------------------------
# Wrapper.
# ----------------------------------------------------------------------------
def graph_norm(h, graph_sizes, gamma, beta, *, eps=EPS,
               force_two_pass=False, row_tile=None):
    N, F = h.shape
    G = int(graph_sizes.shape[0])

    sizes = graph_sizes.astype(jnp.int32)
    ends = jnp.cumsum(sizes)
    starts = ends - sizes
    starts_col = starts.reshape(G, 1)
    ends_col = ends.reshape(G, 1)
    starts_row = starts.reshape(1, G)
    ends_row = ends.reshape(1, G)
    gamma_row = gamma.reshape(1, F).astype(jnp.float32)
    beta_row = beta.reshape(1, F).astype(jnp.float32)

    vmem_limit = _default_vmem_limit_bytes()

    # ---- fused path for small problems: h streamed from HBM once ----
    fused_bytes = 4 * (6 * N * F + 2 * G * N)   # x, xs, rp, out, member (f32)
    if not force_two_pass and fused_bytes <= _FUSED_VMEM_BUDGET:
        return pl.pallas_call(
            functools.partial(_fused_kernel, num_features=F, eps=eps),
            out_shape=jax.ShapeDtypeStruct((N, F), h.dtype),
            compiler_params=pltpu.CompilerParams(vmem_limit_bytes=vmem_limit),
        )(starts_col, ends_col, starts_row, ends_row, h, gamma_row, beta_row)

    # ---- two-pass tiled path ----
    # Row tile: target ~2 MiB blocks, multiple of 8 (lane dim stays = F, which
    # is legal because block dim == array dim), capped so the (G, tile)
    # membership matrix stays small.
    if row_tile is None:
        rows = _TARGET_BLOCK_BYTES // (F * 4)
        rows = min(rows, (8 * 1024 * 1024) // (4 * max(G, 1)))
        tile = max(8, (rows // 8) * 8)
    else:
        tile = max(8, (int(row_tile) // 8) * 8)
    tile = min(tile, N)

    n_tiles = -(-N // tile)
    n_splits = 2 if n_tiles >= 2 else 1      # v7x: stats reduction on both TCs
    tps = -(-n_tiles // n_splits)

    # Pass 1: per-graph partial sums, accumulated directly into the resident
    # output (no VMEM scratch).  Leading axis "parallel", reduction "arbitrary".
    psum = pl.pallas_call(
        functools.partial(_stats_kernel, n_rows=N, tiles_per_split=tps),
        out_shape=jax.ShapeDtypeStruct((n_splits, G, 2 * F), jnp.float32),
        grid_spec=pltpu.PrefetchScalarGridSpec(
            num_scalar_prefetch=0,
            grid=(n_splits, tps),
            in_specs=[
                pl.BlockSpec((G, 1), lambda c, k: (0, 0)),        # graph starts
                pl.BlockSpec((G, 1), lambda c, k: (0, 0)),        # graph ends
                pl.BlockSpec((tile, F),
                             lambda c, k: (jnp.minimum(c * tps + k, n_tiles - 1), 0)),
            ],
            out_specs=pl.BlockSpec((None, G, 2 * F), lambda c, k: (c, 0, 0)),
        ),
        compiler_params=pltpu.CompilerParams(
            dimension_semantics=("parallel", "arbitrary"),
            vmem_limit_bytes=vmem_limit),
    )(starts_col, ends_col, h)

    # Finalize the concatenated [scale | shift] table on tiny (G, F) arrays.
    s = jnp.sum(psum, axis=0)                                  # (G, 2F)
    s1, s2 = s[:, :F], s[:, F:]
    cnt = sizes.astype(jnp.float32).reshape(G, 1)
    mean = s1 / jnp.maximum(cnt, 1.0)
    var = jnp.maximum(s2 - cnt * mean * mean, 0.0) / jnp.maximum(cnt - 1.0, 1.0)
    inv = 1.0 / (jnp.sqrt(var) + eps)
    scale = gamma_row * inv
    shift = beta_row - mean * scale
    params = jnp.concatenate([scale, shift], axis=-1)          # (G, 2F)

    # Pass 2: row-tiled apply, one one-hot gather matmul + fused multiply-add.
    # (For very large G the resident params table could be single-buffered or
    # tiled over graphs; at EquiBind sizes it is a few KiB.)
    return pl.pallas_call(
        functools.partial(_apply_kernel, num_features=F),
        out_shape=jax.ShapeDtypeStruct((N, F), h.dtype),
        grid_spec=pltpu.PrefetchScalarGridSpec(
            num_scalar_prefetch=0,
            grid=(n_tiles,),
            in_specs=[
                pl.BlockSpec((1, G), lambda i: (0, 0)),           # graph starts
                pl.BlockSpec((1, G), lambda i: (0, 0)),           # graph ends
                pl.BlockSpec((tile, F), lambda i: (i, 0)),        # h row tile
                pl.BlockSpec((G, 2 * F), lambda i: (0, 0)),       # [scale|shift]
            ],
            out_specs=pl.BlockSpec((tile, F), lambda i: (i, 0)),
        ),
        compiler_params=pltpu.CompilerParams(
            dimension_semantics=("parallel",),
            vmem_limit_bytes=vmem_limit),
    )(starts_row, ends_row, h, params)


# ----------------------------------------------------------------------------
# Reference + demo.
# ----------------------------------------------------------------------------
def _reference(h, sizes, gamma, beta, eps=EPS):
    outs, start = [], 0
    for s in [int(v) for v in sizes]:
        x = h[start:start + s]
        mean = x.mean(0, keepdims=True)
        std = x.std(0, ddof=1, keepdims=True)
        outs.append((x - mean) / (std + eps))
        start += s
    nx = jnp.concatenate(outs, 0)
    return gamma * nx + beta


if __name__ == "__main__":
    key = jax.random.PRNGKey(0)
    k1, k2 = jax.random.split(key)

    F = 32

    # Case 1: small EquiBind-like batch -> fused single-kernel path.
    sizes1 = jnp.array([6, 10], dtype=jnp.int32)     # 2 graphs, 16 nodes
    N1 = int(jnp.sum(sizes1))
    h1 = jax.random.normal(k1, (N1, F), dtype=jnp.float32)
    gamma1 = jnp.ones((F,), jnp.float32)             # module init: ones / zeros
    beta1 = jnp.zeros((F,), jnp.float32)
    out1 = jax.block_until_ready(graph_norm(h1, sizes1, gamma1, beta1))
    ref1 = _reference(h1, sizes1, gamma1, beta1)
    assert jnp.allclose(out1, ref1, atol=1e-4, rtol=1e-4), "fused path mismatch"

    # Case 2: force the two-pass tiled path (ragged last tile + odd tile count
    # exercising the dual-TensorCore stats split) at a still-small size.
    sizes2 = jnp.array([100, 33, 200], dtype=jnp.int32)   # 3 graphs, 333 nodes
    N2 = int(jnp.sum(sizes2))
    h2 = jax.random.normal(k2, (N2, F), dtype=jnp.float32) * 2.0 + 0.5
    gamma2 = jnp.linspace(0.5, 1.5, F, dtype=jnp.float32)
    beta2 = jnp.linspace(-0.2, 0.3, F, dtype=jnp.float32)
    out2 = jax.block_until_ready(
        graph_norm(h2, sizes2, gamma2, beta2, force_two_pass=True, row_tile=128))
    ref2 = _reference(h2, sizes2, gamma2, beta2)
    assert jnp.allclose(out2, ref2, atol=1e-4, rtol=1e-4), "tiled path mismatch"

    print("KERNEL_OK")
</pallas_src>

<mosaic_0001>
module attributes {stable_mosaic.version = 11 : i64} {
  func.func @_fused_kernel(%arg0: memref<2x1xi32, #tpu.memory_space<vmem>>, %arg1: memref<2x1xi32, #tpu.memory_space<vmem>>, %arg2: memref<1x2xi32, #tpu.memory_space<vmem>>, %arg3: memref<1x2xi32, #tpu.memory_space<vmem>>, %arg4: memref<16x32xf32, #tpu.memory_space<vmem>>, %arg5: memref<1x32xf32, #tpu.memory_space<vmem>>, %arg6: memref<1x32xf32, #tpu.memory_space<vmem>>, %arg7: memref<16x32xf32, #tpu.memory_space<vmem>>) attributes {dimension_semantics = [], scalar_prefetch = 0 : i64, scratch_operands = 0 : i64, tpu.core_type = #tpu.core_type<tc>} {
    %c0 = arith.constant 0 : index
    %c0_0 = arith.constant 0 : index
    %0 = vector.load %arg4[%c0, %c0_0] : memref<16x32xf32, #tpu.memory_space<vmem>>, vector<16x32xf32>
    %1 = tpu.iota {dimensions = array<i32: 1>} : vector<2x16xi32>
    %c0_1 = arith.constant 0 : index
    %c0_2 = arith.constant 0 : index
    %2 = vector.load %arg0[%c0_1, %c0_2] : memref<2x1xi32, #tpu.memory_space<vmem>>, vector<2x1xi32>
    %3 = vector.broadcast %2 : vector<2x1xi32> to vector<2x16xi32>
    %4 = arith.cmpi sge, %1, %3 : vector<2x16xi32>
    %c0_3 = arith.constant 0 : index
    %c0_4 = arith.constant 0 : index
    %5 = vector.load %arg1[%c0_3, %c0_4] : memref<2x1xi32, #tpu.memory_space<vmem>>, vector<2x1xi32>
    %6 = vector.broadcast %5 : vector<2x1xi32> to vector<2x16xi32>
    %7 = arith.cmpi slt, %1, %6 : vector<2x16xi32>
    %8 = arith.andi %4, %7 : vector<2x16xi1>
    %9 = arith.extui %8 : vector<2x16xi1> to vector<2x16xi32>
    %10 = arith.sitofp %9 : vector<2x16xi32> to vector<2x16xf32>
    %11 = arith.mulf %0, %0 : vector<16x32xf32>
    %12 = tpu.concatenate %0, %11 in 1 : vector<16x32xf32>, vector<16x32xf32> -> vector<16x64xf32>
    %cst = arith.constant dense<0.000000e+00> : vector<2x64xf32>
    %13 = tpu.matmul %10, %12, %cst {dimension_numbers = #tpu.dot_dimension_numbers<[1], [0], [0], [1], [0, 0, 1, 1], [], []>, precision = #tpu.contract_precision<fp32>} : vector<2x16xf32>, vector<16x64xf32>, vector<2x64xf32> -> vector<2x64xf32>
    %c0_5 = arith.constant 0 : index
    %c0_6 = arith.constant 0 : index
    %14 = vector.load %arg1[%c0_5, %c0_6] : memref<2x1xi32, #tpu.memory_space<vmem>>, vector<2x1xi32>
    %c0_7 = arith.constant 0 : index
    %c0_8 = arith.constant 0 : index
    %15 = vector.load %arg0[%c0_7, %c0_8] : memref<2x1xi32, #tpu.memory_space<vmem>>, vector<2x1xi32>
    %16 = arith.subi %14, %15 : vector<2x1xi32>
    %17 = arith.sitofp %16 : vector<2x1xi32> to vector<2x1xf32>
    %18 = vector.extract_strided_slice %13 {offsets = [0, 0], sizes = [2, 32], strides = [1, 1]} : vector<2x64xf32> to vector<2x32xf32>
    %cst_9 = arith.constant 1.000000e+00 : f32
    %19 = vector.broadcast %cst_9 : f32 to vector<2x1xf32>
    %20 = arith.maximumf %17, %19 : vector<2x1xf32>
    %21 = vector.broadcast %20 : vector<2x1xf32> to vector<2x32xf32>
    %22 = arith.divf %18, %21 : vector<2x32xf32>
    %23 = vector.extract_strided_slice %13 {offsets = [0, 32], sizes = [2, 32], strides = [1, 1]} : vector<2x64xf32> to vector<2x32xf32>
    %24 = vector.broadcast %17 : vector<2x1xf32> to vector<2x32xf32>
    %25 = arith.mulf %24, %22 : vector<2x32xf32>
    %26 = arith.mulf %25, %22 : vector<2x32xf32>
    %27 = arith.subf %23, %26 : vector<2x32xf32>
    %cst_10 = arith.constant 0.000000e+00 : f32
    %28 = vector.broadcast %cst_10 : f32 to vector<2x32xf32>
    %29 = arith.maximumf %27, %28 : vector<2x32xf32>
    %cst_11 = arith.constant 1.000000e+00 : f32
    %30 = vector.broadcast %cst_11 : f32 to vector<2x1xf32>
    %31 = arith.subf %17, %30 : vector<2x1xf32>
    %cst_12 = arith.constant 1.000000e+00 : f32
    %32 = vector.broadcast %cst_12 : f32 to vector<2x1xf32>
    %33 = arith.maximumf %31, %32 : vector<2x1xf32>
    %34 = vector.broadcast %33 : vector<2x1xf32> to vector<2x32xf32>
    %35 = arith.divf %29, %34 : vector<2x32xf32>
    %36 = math.sqrt %35 : vector<2x32xf32>
    %cst_13 = arith.constant 9.99999974E-6 : f32
    %37 = vector.broadcast %cst_13 : f32 to vector<2x32xf32>
    %38 = arith.addf %36, %37 : vector<2x32xf32>
    %cst_14 = arith.constant 1.000000e+00 : f32
    %39 = vector.broadcast %cst_14 : f32 to vector<2x32xf32>
    %40 = arith.divf %39, %38 : vector<2x32xf32>
    %c0_15 = arith.constant 0 : index
    %c0_16 = arith.constant 0 : index
    %41 = vector.load %arg5[%c0_15, %c0_16] : memref<1x32xf32, #tpu.memory_space<vmem>>, vector<1x32xf32>
    %42 = vector.broadcast %41 : vector<1x32xf32> to vector<2x32xf32>
    %43 = arith.mulf %42, %40 : vector<2x32xf32>
    %c0_17 = arith.constant 0 : index
    %c0_18 = arith.constant 0 : index
    %44 = vector.load %arg6[%c0_17, %c0_18] : memref<1x32xf32, #tpu.memory_space<vmem>>, vector<1x32xf32>
    %45 = arith.mulf %22, %43 : vector<2x32xf32>
    %46 = vector.broadcast %44 : vector<1x32xf32> to vector<2x32xf32>
    %47 = arith.subf %46, %45 : vector<2x32xf32>
    %48 = tpu.concatenate %43, %47 in 1 : vector<2x32xf32>, vector<2x32xf32> -> vector<2x64xf32>
    %49 = tpu.iota {dimensions = array<i32: 0>} : vector<16x1xi32>
    %c0_19 = arith.constant 0 : index
    %c0_20 = arith.constant 0 : index
    %50 = vector.load %arg2[%c0_19, %c0_20] : memref<1x2xi32, #tpu.memory_space<vmem>>, vector<1x2xi32>
    %51 = vector.broadcast %49 : vector<16x1xi32> to vector<16x2xi32>
    %52 = vector.broadcast %50 : vector<1x2xi32> to vector<16x2xi32>
    %53 = arith.cmpi sge, %51, %52 : vector<16x2xi32>
    %c0_21 = arith.constant 0 : index
    %c0_22 = arith.constant 0 : index
    %54 = vector.load %arg3[%c0_21, %c0_22] : memref<1x2xi32, #tpu.memory_space<vmem>>, vector<1x2xi32>
    %55 = vector.broadcast %49 : vector<16x1xi32> to vector<16x2xi32>
    %56 = vector.broadcast %54 : vector<1x2xi32> to vector<16x2xi32>
    %57 = arith.cmpi slt, %55, %56 : vector<16x2xi32>
    %58 = arith.andi %53, %57 : vector<16x2xi1>
    %59 = arith.extui %58 : vector<16x2xi1> to vector<16x2xi32>
    %60 = arith.sitofp %59 : vector<16x2xi32> to vector<16x2xf32>
    %cst_23 = arith.constant dense<0.000000e+00> : vector<16x64xf32>
    %61 = tpu.matmul %60, %48, %cst_23 {dimension_numbers = #tpu.dot_dimension_numbers<[1], [0], [0], [1], [0, 0, 1, 1], [], []>} : vector<16x2xf32>, vector<2x64xf32>, vector<16x64xf32> -> vector<16x64xf32>
    %62 = vector.extract_strided_slice %61 {offsets = [0, 0], sizes = [16, 32], strides = [1, 1]} : vector<16x64xf32> to vector<16x32xf32>
    %63 = arith.mulf %0, %62 : vector<16x32xf32>
    %64 = vector.extract_strided_slice %61 {offsets = [0, 32], sizes = [16, 32], strides = [1, 1]} : vector<16x64xf32> to vector<16x32xf32>
    %65 = arith.addf %63, %64 : vector<16x32xf32>
    %c0_24 = arith.constant 0 : index
    %c0_25 = arith.constant 0 : index
    %66 = vector.load %arg7[%c0_24, %c0_25] : memref<16x32xf32, #tpu.memory_space<vmem>>, vector<16x32xf32>
    tpu.vector_store %arg7[%c0_24, %c0_25], %65 {strides = array<i32>} : memref<16x32xf32, #tpu.memory_space<vmem>>, vector<16x32xf32>,
    return
  }
}

</mosaic_0001>

<llo_original>
// kernel: tpu_custom_call.1
$region0: #{tpu_custom_call.1}
  #allocation0 [shape = 'u32[]', space=smem, size = 0x4, offset = 0x4, fixed_abs, tag = 'smem constant byte address 0x4 - core index']
  #allocation1 [shape = 'u32[72,128]{1,0:T(1,128)}', space=vmem, size = 0x9000, scoped, tag = 'internal scratch']
  %s0 = inlined_call_operand.vmem [shape: s32[2,1], index: 0, kind: input, shape index: {}]
  %s1 = inlined_call_operand.vmem [shape: s32[2,1], index: 1, kind: input, shape index: {}]
  %s2 = inlined_call_operand.vmem [shape: s32[1,2], index: 2, kind: input, shape index: {}]
  %s3 = inlined_call_operand.vmem [shape: s32[1,2], index: 3, kind: input, shape index: {}]
  %s4 = inlined_call_operand.hbm [shape: f32[16,32], index: 4, kind: input, shape index: {}]
  %s5 = inlined_call_operand.vmem [shape: f32[1,32], index: 5, kind: input, shape index: {}]
  %s6 = inlined_call_operand.vmem [shape: f32[1,32], index: 6, kind: input, shape index: {}]
  %s7 = inlined_call_operand.hbm [shape: f32[16,32], index: 7, kind: output, shape index: {}]
  %s8 = sld [smem:[#allocation0]]
  $region42: #{tpu_custom_call.1} parent=0
    _
  %s10 = ssub.s32 1, %s8
  %s11 = scalar_select 0, %s10, %s8
  $region1: #{tpu_custom_call.1} parent=0
    #allocation2 [shape = 'u8[8192]{0}', space=vmem, size = 0x2000, scoped, tag = 'input window, operand 4, single buffered']
    #allocation3 [shape = 's32[1]{0}', space=sflag, size = 0x4, scoped, tag = 'scoped memory for tpu_custom_call.1']
    #allocation4 [shape = 's32[1]{0}', space=sflag, size = 0x4, scoped, tag = 'scoped memory for tpu_custom_call.1']
    #allocation5 [shape = 'u8[8192]{0}', space=vmem, size = 0x2000, scoped, tag = 'output window, operand 0, single buffered']
    %12 = vsyncpa [#allocation3], 0
    %13 = vsyncpa [#allocation4], 0
    // Predicated region
    $region2: #{tpu_custom_call.1} parent=1 // pred_check
      _
    $region3: #{tpu_custom_call.1} parent=1 // pred_check_branch
      %15 = sbr.rel (0) target = $region5
    $region4: #{tpu_custom_call.1} parent=1 // pred_region
      _
    $region5: #{tpu_custom_call.1} parent=1 // pred_fallthru
      _
    // Predicated region
    $region6: #{tpu_custom_call.1} parent=1 // pred_check
      _
    $region7: #{tpu_custom_call.1} parent=1 // pred_check_branch
      %17 = sbr.rel (0) target = $region9
    $region8: #{tpu_custom_call.1} parent=1 // pred_region
      _
    $region9: #{tpu_custom_call.1} parent=1 // pred_fallthru
      _
    // Predicated region
    $region10: #{tpu_custom_call.1} parent=1 // pred_check
      _
    $region11: #{tpu_custom_call.1} parent=1 // pred_check_branch
      %19 = sbr.rel (0) target = $region13
    $region12: #{tpu_custom_call.1} parent=1 // pred_region
      _
    $region13: #{tpu_custom_call.1} parent=1 // pred_fallthru
      _
    // Predicated region
    $region14: #{tpu_custom_call.1} parent=1 // pred_check
      _
    $region15: #{tpu_custom_call.1} parent=1 // pred_check_branch
      %21 = sbr.rel (0) target = $region17
    $region16: #{tpu_custom_call.1} parent=1 // pred_region
      _
    $region17: #{tpu_custom_call.1} parent=1 // pred_fallthru
      _
    // Predicated region
    $region18: #{tpu_custom_call.1} parent=1 // pred_check
      _
    $region19: #{tpu_custom_call.1} parent=1 // pred_check_branch
      %23 = sbr.rel (0) target = $region21
    $region20: #{tpu_custom_call.1} parent=1 // pred_region
      %25 = vsyncadd [#allocation3], 0
      %s26 = sshll.u32 %s4, 4
      %s27 = int_to_ptr.hbm [resolvable:$true] %s26
      %s28 = sshll.u32 [#allocation2], 4
      %s29 = int_to_ptr.vmem [resolvable:$true] %s28
      %34 = dma.hbm_to_vmem [thread:$0]  %s27, 256, %s29, [#allocation3], 128, 128, 8
    $region21: #{tpu_custom_call.1} parent=1 // pred_fallthru
      _
    // Predicated region
    $region22: #{tpu_custom_call.1} parent=1 // pred_check
      _
    $region23: #{tpu_custom_call.1} parent=1 // pred_check_branch
      %36 = sbr.rel (0) target = $region25
    $region24: #{tpu_custom_call.1} parent=1 // pred_region
      _
    $region25: #{tpu_custom_call.1} parent=1 // pred_fallthru
      _
    // Predicated region
    $region26: #{tpu_custom_call.1} parent=1 // pred_check
      _
    $region27: #{tpu_custom_call.1} parent=1 // pred_check_branch
      %38 = sbr.rel (0) target = $region29
    $region28: #{tpu_custom_call.1} parent=1 // pred_region
      _
    $region29: #{tpu_custom_call.1} parent=1 // pred_fallthru
      _
    // Predicated region
    $region30: #{tpu_custom_call.1} parent=1 // pred_check
      _
    $region31: #{tpu_custom_call.1} parent=1 // pred_check_branch
      %40 = sbr.rel (0) target = $region33
    $region32: #{tpu_custom_call.1} parent=1 // pred_region
      %42 = dma.done [#allocation3], 256
    $region33: #{tpu_custom_call.1} parent=1 // pred_fallthru
      _
    %v43 = vld [vmem:[#allocation2] sm:$0xff]
    %v44 = vld [vmem:[#allocation2 + $0x8] sm:$0xff]
    %v45 = vlaneseq
    %v46 = vand.u32 %v45, 127
    %v47 = vld [vmem:[%s0] sm:$0x3]
    %48 = vset.pattern.permute.xlu0 0
    %49 = vperm.xlu0 %48, %v47
    %v50 = vpop.permute.xlu0 %49
    %vm51 = vcmp.ge.s32.totalorder %v46, %v50
    %v52 = vld [vmem:[%s1] sm:$0x3]
    %53 = vset.pattern.permute.xlu0 0
    %54 = vperm.xlu0 %53, %v52
    %v55 = vpop.permute.xlu0 %54
    %vm56 = vcmp.lt.s32.totalorder %v46, %v55
    %vm57 = vmand %vm51, %vm56
    %v58 = vsel %vm57, 1, 0
    %v59 = vcvt.s32.f32 %v58
    %v60 = vmul.f32 %v43, %v43
    %v61 = vmul.f32 %v44, %v44
    %64 = vrot.lane.b32.xlu0 %v60, 32
    %v65 = vpop.permute.xlu0 %64
    %66 = vrot.lane.b32.xlu0 %v61, 32
    %v67 = vpop.permute.xlu0 %66
    %vm70 = vcmask 261120
    %v71 = vsel %vm70, %v43, %v65
    %v72 = vsel %vm70, %v44, %v67
    %vm73 = vcmask 130048
    %v75 = vsel %vm73, %v59, 0
    %77 = vmatpush.msra.mxu0 0.0
    %78 = vmatpush.msra.mxu0 0.0
    %79 = vmatpush.msra.mxu0 0.0
    %80 = vmatpush.msra.mxu0 0.0
    %81 = vmatpush.msra.mxu0 0.0
    %82 = vmatpush.msra.mxu0 0.0
    %83 = vmatpush.msra.mxu0 0.0
    %84 = vmatpush.msra.mxu0 0.0
    %85 = vmatpush.msra.mxu0 0.0
    %86 = vmatpush.msra.mxu0 0.0
    %87 = vmatpush.msra.mxu0 0.0
    %88 = vmatpush.msra.mxu0 0.0
    %89 = vmatpush.msra.mxu0 0.0
    %90 = vmatpush.msra.mxu0 0.0
    %v91 = vand.u32 %v72, 4294901760
    %92 = vmatpush.msra.mxu0 %v91
    %v93 = vand.u32 %v71, 4294901760
    %94 = vmatpush.msra.mxu0 %v93
    %v95 = vand.u32 %v75, 4294901760
    %v96 = vsub.f32 %v75, %v95
    %v97 = vand.u32 %v96, 4294901760
    %v98 = vsub.f32 %v96, %v97
    %v99 = vand.u32 %v98, 4294901760
    %100 = vmatmul.f32.gmra.mxu0 %v99
    %v101 = vpop.f32.mrf.mxu0
    %v102 = vadd.f32 0.0, %v101
    %103 = vdwg.mxu0
    %104 = vmatpush.msra.mxu0 0.0
    %105 = vmatpush.msra.mxu0 0.0
    %106 = vmatpush.msra.mxu0 0.0
    %107 = vmatpush.msra.mxu0 0.0
    %108 = vmatpush.msra.mxu0 0.0
    %109 = vmatpush.msra.mxu0 0.0
    %110 = vmatpush.msra.mxu0 0.0
    %111 = vmatpush.msra.mxu0 0.0
    %112 = vmatpush.msra.mxu0 0.0
    %113 = vmatpush.msra.mxu0 0.0
    %114 = vmatpush.msra.mxu0 0.0
    %115 = vmatpush.msra.mxu0 0.0
    %116 = vmatpush.msra.mxu0 0.0
    %117 = vmatpush.msra.mxu0 0.0
    %v118 = vand.u32 %v72, 4294901760
    %v119 = vsub.f32 %v72, %v118
    %v120 = vand.u32 %v119, 4294901760
    %v121 = vsub.f32 %v119, %v120
    %v122 = vand.u32 %v121, 4294901760
    %123 = vmatpush.msra.mxu0 %v122
    %v124 = vand.u32 %v71, 4294901760
    %v125 = vsub.f32 %v71, %v124
    %v126 = vand.u32 %v125, 4294901760
    %v127 = vsub.f32 %v125, %v126
    %v128 = vand.u32 %v127, 4294901760
    %129 = vmatpush.msra.mxu0 %v128
    %v130 = vand.u32 %v75, 4294901760
    %131 = vmatmul.f32.gmra.mxu0 %v130
    %v132 = vpop.f32.mrf.mxu0
    %v133 = vadd.f32 %v102, %v132
    %134 = vdwg.mxu0
    %135 = vmatpush.msra.mxu0 0.0
    %136 = vmatpush.msra.mxu0 0.0
    %137 = vmatpush.msra.mxu0 0.0
    %138 = vmatpush.msra.mxu0 0.0
    %139 = vmatpush.msra.mxu0 0.0
    %140 = vmatpush.msra.mxu0 0.0
    %141 = vmatpush.msra.mxu0 0.0
    %142 = vmatpush.msra.mxu0 0.0
    %143 = vmatpush.msra.mxu0 0.0
    %144 = vmatpush.msra.mxu0 0.0
    %145 = vmatpush.msra.mxu0 0.0
    %146 = vmatpush.msra.mxu0 0.0
    %147 = vmatpush.msra.mxu0 0.0
    %148 = vmatpush.msra.mxu0 0.0
    %v149 = vand.u32 %v72, 4294901760
    %v150 = vsub.f32 %v72, %v149
    %151 = vmatpush.msra.mxu0 %v150
    %v152 = vand.u32 %v71, 4294901760
    %v153 = vsub.f32 %v71, %v152
    %154 = vmatpush.msra.mxu0 %v153
    %v155 = vand.u32 %v75, 4294901760
    %v156 = vsub.f32 %v75, %v155
    %157 = vmatmul.f32.gmra.mxu0 %v156
    %v158 = vpop.f32.mrf.mxu0
    %v159 = vadd.f32 %v133, %v158
    %160 = vdwg.mxu0
    %161 = vmatpush.msra.mxu0 0.0
    %162 = vmatpush.msra.mxu0 0.0
    %163 = vmatpush.msra.mxu0 0.0
    %164 = vmatpush.msra.mxu0 0.0
    %165 = vmatpush.msra.mxu0 0.0
    %166 = vmatpush.msra.mxu0 0.0
    %167 = vmatpush.msra.mxu0 0.0
    %168 = vmatpush.msra.mxu0 0.0
    %169 = vmatpush.msra.mxu0 0.0
    %170 = vmatpush.msra.mxu0 0.0
    %171 = vmatpush.msra.mxu0 0.0
    %172 = vmatpush.msra.mxu0 0.0
    %173 = vmatpush.msra.mxu0 0.0
    %174 = vmatpush.msra.mxu0 0.0
    %v175 = vand.u32 %v72, 4294901760
    %176 = vmatpush.msra.mxu0 %v175
    %v177 = vand.u32 %v71, 4294901760
    %178 = vmatpush.msra.mxu0 %v177
    %v179 = vand.u32 %v75, 4294901760
    %v180 = vsub.f32 %v75, %v179
    %v181 = vand.u32 %v180, 4294901760
    %182 = vmatmul.f32.gmra.mxu0 %v181
    %v183 = vpop.f32.mrf.mxu0
    %v184 = vadd.f32 %v159, %v183
    %185 = vdwg.mxu0
    %186 = vmatpush.msra.mxu0 0.0
    %187 = vmatpush.msra.mxu0 0.0
    %188 = vmatpush.msra.mxu0 0.0
    %189 = vmatpush.msra.mxu0 0.0
    %190 = vmatpush.msra.mxu0 0.0
    %191 = vmatpush.msra.mxu0 0.0
    %192 = vmatpush.msra.mxu0 0.0
    %193 = vmatpush.msra.mxu0 0.0
    %194 = vmatpush.msra.mxu0 0.0
    %195 = vmatpush.msra.mxu0 0.0
    %196 = vmatpush.msra.mxu0 0.0
    %197 = vmatpush.msra.mxu0 0.0
    %198 = vmatpush.msra.mxu0 0.0
    %199 = vmatpush.msra.mxu0 0.0
    %v200 = vand.u32 %v72, 4294901760
    %v201 = vsub.f32 %v72, %v200
    %v202 = vand.u32 %v201, 4294901760
    %203 = vmatpush.msra.mxu0 %v202
    %v204 = vand.u32 %v71, 4294901760
    %v205 = vsub.f32 %v71, %v204
    %v206 = vand.u32 %v205, 4294901760
    %207 = vmatpush.msra.mxu0 %v206
    %v208 = vand.u32 %v75, 4294901760
    %209 = vmatmul.f32.gmra.mxu0 %v208
    %v210 = vpop.f32.mrf.mxu0
    %v211 = vadd.f32 %v184, %v210
    %212 = vdwg.mxu0
    %213 = vmatpush.msra.mxu0 0.0
    %214 = vmatpush.msra.mxu0 0.0
    %215 = vmatpush.msra.mxu0 0.0
    %216 = vmatpush.msra.mxu0 0.0
    %217 = vmatpush.msra.mxu0 0.0
    %218 = vmatpush.msra.mxu0 0.0
    %219 = vmatpush.msra.mxu0 0.0
    %220 = vmatpush.msra.mxu0 0.0
    %221 = vmatpush.msra.mxu0 0.0
    %222 = vmatpush.msra.mxu0 0.0
    %223 = vmatpush.msra.mxu0 0.0
    %224 = vmatpush.msra.mxu0 0.0
    %225 = vmatpush.msra.mxu0 0.0
    %226 = vmatpush.msra.mxu0 0.0
    %v227 = vand.u32 %v72, 4294901760
    %228 = vmatpush.msra.mxu0 %v227
    %v229 = vand.u32 %v71, 4294901760
    %230 = vmatpush.msra.mxu0 %v229
    %v231 = vand.u32 %v75, 4294901760
    %232 = vmatmul.f32.gmra.mxu0 %v231
    %v233 = vpop.f32.mrf.mxu0
    %v234 = vadd.f32 %v211, %v233
    %235 = vdwg.mxu0
    %v236 = vsub.s32 %v52, %v47
    %v237 = vcvt.s32.f32 %v236
    %v238 = vmax.f32 %v237, 1.0
    %240 = vset.pattern.permute.xlu0 0
    %241 = vperm.xlu0 %240, %v238
    %v242 = vpop.permute.xlu0 %241
    %v244 = vrcp.pop %v242
    %v245 = vmul.f32 %v242, %v244
    %v246 = vsub.f32 1.0, %v245
    %v247 = vmul.f32 %v244, %v246
    %v248 = vadd.f32 %v244, %v247
    %vm249 = vweird.f32 %v242
    %vm250 = vweird.f32 %v244
    %vm251 = vmor %vm249, %vm250
    %v252 = vsel %vm251, %v244, %v248
    %v253 = vand.u32 2147483647, %v242
    %vm254 = vcmp.eq.f32.partialorder %v253, 8.507059e+37
    %v255 = vand.u32 %v242, 2147483648
    %v256 = vor.u32 1.1754944e-38, %v255
    %v257 = vsel %vm254, %v256, %v252
    %v258 = vmul.f32 %v234, %v257
    %260 = vset.pattern.permute.xlu0 0
    %261 = vperm.xlu0 %260, %v237
    %v262 = vpop.permute.xlu0 %261
    %v264 = vmul.f32 %v262, %v258
    %v265 = vmul.f32 %v264, %v258
    %267 = vrot.lane.b32.xlu0 %v265, 32
    %v268 = vpop.permute.xlu0 %267
    %v270 = vsub.f32 %v234, %v268
    %v271 = vmax.f32 %v270, 0.0
    %v272 = vsub.f32 %v237, 1.0
    %v273 = vmax.f32 %v272, 1.0
    %275 = vset.pattern.permute.xlu0 0
    %276 = vperm.xlu0 %275, %v273
    %v277 = vpop.permute.xlu0 %276
    %v279 = vrcp.pop %v277
    %v280 = vmul.f32 %v277, %v279
    %v281 = vsub.f32 1.0, %v280
    %v282 = vmul.f32 %v279, %v281
    %v283 = vadd.f32 %v279, %v282
    %vm284 = vweird.f32 %v277
    %vm285 = vweird.f32 %v279
    %vm286 = vmor %vm284, %vm285
    %v287 = vsel %vm286, %v279, %v283
    %v288 = vand.u32 2147483647, %v277
    %vm289 = vcmp.eq.f32.partialorder %v288, 8.507059e+37
    %v290 = vand.u32 %v277, 2147483648
    %v291 = vor.u32 1.1754944e-38, %v290
    %v292 = vsel %vm289, %v291, %v287
    %v293 = vmul.f32 %v271, %v292
    %v294 = vrsqrt.pop %v293
    %v295 = vmul.f32 %v294, %v293
    %v296 = vmul.f32 %v295, %v294
    %v297 = vmul.f32 0.5, %v296
    %v298 = vsub.f32 1.5, %v297
    %v299 = vmul.f32 %v294, %v298
    %v300 = vmul.f32 %v293, %v299
    %vm301 = vcmp.eq.f32.partialorder %v293, inf
    %v302 = vsel %vm301, %v293, %v300
    %vm303 = vcmp.eq.f32.partialorder %v293, 0.0
    %v304 = vand.u32 %v293, 2147483648
    %v305 = vsel %vm303, %v304, %v302
    %v306 = vadd.f32 %v305, 1e-05
    %v307 = vrcp.pop %v306
    %v308 = vmul.f32 %v306, %v307
    %v309 = vsub.f32 1.0, %v308
    %v310 = vmul.f32 %v307, %v309
    %v311 = vadd.f32 %v307, %v310
    %vm312 = vweird.f32 %v306
    %vm313 = vweird.f32 %v307
    %vm314 = vmor %vm312, %vm313
    %v315 = vsel %vm314, %v307, %v311
    %v316 = vand.u32 2147483647, %v306
    %vm317 = vcmp.eq.f32.partialorder %v316, 8.507059e+37
    %v318 = vand.u32 %v306, 2147483648
    %v319 = vor.u32 1.1754944e-38, %v318
    %v320 = vsel %vm317, %v319, %v315
    %v321 = vmul.f32 1.0, %v320
    %v322 = vld [vmem:[%s5] sm:$0x1]
    %v324 = vperm.slane %v322, 0
    %327 = vrot.lane.b32.xlu0 %v321, 96
    %v328 = vpop.permute.xlu0 %327
    %v330 = vmul.f32 %v324, %v328
    %v331 = vld [vmem:[%s6] sm:$0x1]
    %v332 = vmul.f32 %v258, %v330
    %v334 = vperm.slane %v331, 0
    %v336 = vsub.f32 %v334, %v332
    %338 = vrot.lane.b32.xlu0 %v336, 32
    %v339 = vpop.permute.xlu0 %338
    %v341 = vsel %vm70, %v330, %v339
    %v342 = vlaneseq
    %v343 = vshrl.u32 %v342, 7
    %v344 = vadd.s32 %v343, 8
    %v345 = vld [vmem:[%s2] sm:$0x1]
    %v346 = vperm.slane %v345, 0
    %vm347 = vcmp.ge.s32.totalorder %v343, %v346
    %vm348 = vcmp.ge.s32.totalorder %v344, %v346
    %v349 = vld [vmem:[%s3] sm:$0x1]
    %v350 = vperm.slane %v349, 0
    %vm351 = vcmp.lt.s32.totalorder %v343, %v350
    %vm352 = vcmp.lt.s32.totalorder %v344, %v350
    %vm353 = vmand %vm347, %vm351
    %vm354 = vmand %vm348, %vm352
    %v355 = vsel %vm353, 1, 0
    %v356 = vsel %vm354, 1, 0
    %v357 = vcvt.s32.f32 %v355
    %v358 = vcvt.s32.f32 %v356
    %vm359 = vcmask 15360
    %v361 = vsel %vm359, %v357, 0
    %v364 = vsel %vm359, %v358, 0
    %vm366 = vcmask 1041408
    %v368 = vsel %vm366, %v341, 0
    %370 = vmatpush.msra.mxu0 0.0
    %371 = vmatpush.msra.mxu0 0.0
    %372 = vmatpush.msra.mxu0 0.0
    %373 = vmatpush.msra.mxu0 0.0
    %374 = vmatpush.msra.mxu0 0.0
    %375 = vmatpush.msra.mxu0 0.0
    %376 = vmatpush.msra.mxu0 0.0
    %377 = vmatpush.msra.mxu0 0.0
    %378 = vmatpush.msra.mxu0 0.0
    %379 = vmatpush.msra.mxu0 0.0
    %380 = vmatpush.msra.mxu0 0.0
    %381 = vmatpush.msra.mxu0 0.0
    %382 = vmatpush.msra.mxu0 0.0
    %383 = vmatpush.msra.mxu0 0.0
    %384 = vmatpush.msra.mxu0 0.0
    %385 = vmatpush.msra.mxu0 %v368
    %386 = vmatmul.f32.gmra.mxu0 %v361
    %v387 = vpop.f32.mrf.mxu0
    %v388 = vadd.f32 0.0, %v387
    %389 = vmatmul.f32.gmra.mxu0 %v364
    %v390 = vpop.f32.mrf.mxu0
    %v391 = vadd.f32 0.0, %v390
    %392 = vdwg.mxu0
    %v393 = vmul.f32 %v43, %v388
    %v394 = vmul.f32 %v44, %v391
    %397 = vrot.lane.b32.xlu0 %v388, 96
    %v398 = vpop.permute.xlu0 %397
    %399 = vrot.lane.b32.xlu0 %v391, 96
    %v400 = vpop.permute.xlu0 %399
    %v403 = vadd.f32 %v393, %v398
    %v404 = vadd.f32 %v394, %v400
    %405 = vst.msk [vmem:[#allocation5] sm:$0xff] %vm70, %v403
    %406 = vst.msk [vmem:[#allocation5 + $0x8] sm:$0xff] %vm70, %v404
    // Predicated region
    $region34: #{tpu_custom_call.1} parent=1 // pred_check
      _
    $region35: #{tpu_custom_call.1} parent=1 // pred_check_branch
      %408 = sbr.rel (0) target = $region37
    $region36: #{tpu_custom_call.1} parent=1 // pred_region
      %410 = vsyncadd [#allocation4], 0
      %s411 = sshll.u32 [#allocation5], 4
      %s412 = int_to_ptr.vmem [resolvable:$true] %s411
      %s413 = sshll.u32 %s7, 4
      %s414 = int_to_ptr.hbm [resolvable:$true] %s413
      %419 = dma.vmem_to_hbm [thread:$0]  %s412, 256, %s414, [#allocation4], 128, 128, 8
    $region37: #{tpu_custom_call.1} parent=1 // pred_fallthru
      _
    // Predicated region
    $region38: #{tpu_custom_call.1} parent=1 // pred_check
      _
    $region39: #{tpu_custom_call.1} parent=1 // pred_check_branch
      %421 = sbr.rel (0) target = $region41
    $region40: #{tpu_custom_call.1} parent=1 // pred_region
      %423 = dma.done [#allocation4], 256
    $region41: #{tpu_custom_call.1} parent=1 // pred_fallthru
      _
    %424 = vsyncpa [#allocation3], 1
    %425 = vsyncpa [#allocation4], 1

</llo_original>
